<compile_context>
chip_gen: v7x
topology: tpu7x:2x2x1
jax: 0.10.0
libtpu: 0.0.40
codegen_flags: <defaults>
</compile_context>

<pallas_src>
import functools

import jax
import jax.numpy as jnp
import numpy as np
from jax.experimental import pallas as pl
from jax.experimental.pallas import tpu as pltpu


def _round_up(x, m):
    return ((x + m - 1) // m) * m


def _cdiv(a, b):
    return (a + b - 1) // b


def _vmem_capacity_bytes():
    """Per-core VMEM capacity (generation-aware); conservative fallback = v7x (64 MiB)."""
    try:
        return int(pltpu.get_tpu_info().vmem_capacity_bytes)
    except Exception:
        return 64 << 20


def _plan_tiles(N, M, C, out_itemsize):
    """Pick (tn, tc, vmem_limit_bytes) for the (row, col) grid."""
    cap = _vmem_capacity_bytes()
    budget = cap // 2                      # leave half of VMEM for the compiler
    headroom = 8 << 20

    # Column tile: full width if small, else lane-dense multiple of 128.
    tc = C if C <= 2048 else 2048

    # Row tile: ~4 MiB output blocks, sublane-aligned for out_dtype, <= 4096 rows.
    row_align = max(8, 32 // out_itemsize)
    tn = (4 << 20) // max(1, tc * out_itemsize)
    tn = max(row_align, min(4096, (tn // row_align) * row_align))
    if tn >= N:
        tn = N
    # Keep >= 2 row steps so the "parallel" axis actually splits across v7x's cores.
    if N >= 2 * row_align and _cdiv(N, tn) < 2:
        tn = min(tn, _round_up(_cdiv(N, 2), row_align))

    def usage(tn_, tc_):
        tn_p = _round_up(max(tn_, 1), 8)
        uid = tn_p * 128 * 4 * 2                        # (tn,1) ids, lane-padded, 2 bufs
        maps = 2 * 8 * _round_up(M, 128) * 4 * 2        # keys+vals, worst case 2 bufs
        out = tn_p * _round_up(min(tc_, C), 128) * out_itemsize * 2
        idx = tn_p * 128 * 4                            # cached-index scratch
        return uid + maps + out + idx

    while usage(tn, tc) + headroom > budget and tn > row_align:
        tn = max(row_align, ((tn // 2) // row_align) * row_align)
    while usage(tn, tc) + headroom > budget and tc > 128:
        tc = max(128, ((tc // 2) // 128) * 128)

    vmem_limit = int(min(budget, max(32 << 20, usage(tn, tc) + headroom)))
    return tn, tc, vmem_limit


def _one_hot_kernel(uid_ref, keys_ref, vals_ref, out_ref, idx_ref, *,
                    default_idx, tc):
    j = pl.program_id(1)

    # The O(tn*M) lookup runs once per row tile (column axis is innermost);
    # the matched index is cached in VMEM scratch and reused for every column tile.
    @pl.when(j == 0)
    def _():
        uid = uid_ref[...]                  # (tn, 1) int32 query ids
        keys = keys_ref[...]                # (1, M)  mapping keys (unique)
        vals = vals_ref[...]                # (1, M)  mapping values (0..M-1)
        hit = jnp.max(jnp.where(uid == keys, vals, -1), axis=-1, keepdims=True)
        idx_ref[...] = jnp.where(hit >= 0, hit, default_idx)

    # Lane-dense one-hot tile emitted directly: col index == cached row index.
    col = j * tc + jax.lax.broadcasted_iota(jnp.int32, out_ref.shape, 1)  # (tn, tc)
    out_ref[...] = (col == idx_ref[...]).astype(out_ref.dtype)


def one_hot_encode(user_ids, keys, vals, num_classes, default_idx,
                   *, out_dtype=jnp.float32):
    """Pallas implementation of OneHotEncoder.forward.

    user_ids:   (N,) integer array of query user ids
    keys/vals:  (M,) mapping keys / values (from the host-side dict)
    num_classes = len(mapping) + padding, default_idx = num_classes - 1
    """
    N = int(user_ids.shape[0])
    M = int(keys.shape[0])
    C = int(num_classes)
    out_itemsize = jnp.dtype(out_dtype).itemsize

    # TODO(synk): ids are compared as int32 (torch uses int64 / Python ints);
    # distinct ids differing only above 2**31 would collide.
    uid2d = user_ids.astype(jnp.int32).reshape(N, 1)
    keys2d = keys.astype(jnp.int32).reshape(1, M)
    vals2d = vals.astype(jnp.int32).reshape(1, M)

    tn, tc, vmem_limit = _plan_tiles(N, M, C, out_itemsize)
    grid = (_cdiv(N, tn), _cdiv(C, tc))

    kernel = functools.partial(_one_hot_kernel,
                               default_idx=int(default_idx), tc=int(tc))

    def build(resident_maps):
        if resident_maps:
            # Whole mapping tables VMEM-resident: one copy, no double-buffering,
            # no per-grid-step DMA (their contents never change across the grid).
            map_specs = [pl.BlockSpec(memory_space=pltpu.MemorySpace.VMEM),
                         pl.BlockSpec(memory_space=pltpu.MemorySpace.VMEM)]
        else:
            # Fallback: constant-index-map tiled blocks (Pallas skips re-DMA when
            # the block index is unchanged, but keeps a double buffer).
            map_specs = [pl.BlockSpec((1, M), lambda i, j: (0, 0)),
                         pl.BlockSpec((1, M), lambda i, j: (0, 0))]
        return pl.pallas_call(
            kernel,
            out_shape=jax.ShapeDtypeStruct((N, C), out_dtype),
            grid_spec=pltpu.PrefetchScalarGridSpec(
                num_scalar_prefetch=0,
                grid=grid,
                in_specs=[pl.BlockSpec((tn, 1), lambda i, j: (i, 0))] + map_specs,
                out_specs=pl.BlockSpec((tn, tc), lambda i, j: (i, j)),
                scratch_shapes=[pltpu.VMEM((tn, 1), jnp.int32)],
            ),
            compiler_params=pltpu.CompilerParams(
                dimension_semantics=("parallel", "arbitrary"),
                vmem_limit_bytes=vmem_limit,
            ),
        )

    try:
        return build(True)(uid2d, keys2d, vals2d)
    except Exception:
        # Older jax / lowerings that reject untiled VMEM-resident input specs.
        return build(False)(uid2d, keys2d, vals2d)


class OneHotEncoder:
    """JAX/Pallas port of the torch OneHotEncoder user tower."""

    def __init__(self, all_user_ids, one_hot_vector_padding=None):
        # Mirrors the torch __init__ (duplicate ids keep the LAST index, like dict).
        # NOTE: with duplicate ids torch's F.one_hot would raise (stored index can
        # exceed num_classes); this port emits an all-zero row for that edge case.
        self.mapping = {int(_id): i for i, _id in enumerate(all_user_ids)}
        self.padding = one_hot_vector_padding or 0
        self._keys = jnp.asarray(list(self.mapping.keys()), dtype=jnp.int32)
        self._vals = jnp.asarray(list(self.mapping.values()), dtype=jnp.int32)

    def get_embedding_length(self) -> int:
        return len(self.mapping) + self.padding

    def __call__(self, user_ids, out_dtype=jnp.float32):
        num_classes = len(self.mapping) + self.padding
        default_idx = num_classes - 1
        return one_hot_encode(jnp.asarray(user_ids), self._keys, self._vals,
                              num_classes, default_idx, out_dtype=out_dtype)


if __name__ == "__main__":
    key = jax.random.PRNGKey(0)
    k_sel, k_unk = jax.random.split(key)

    M_IDS = 120      # number of known user ids
    PADDING = 8      # -> one-hot width 128 (lane-dense)
    N = 64           # number of queries

    all_user_ids = [1000 + 3 * i for i in range(M_IDS)]
    encoder = OneHotEncoder(all_user_ids, one_hot_vector_padding=PADDING)

    # Deterministic mix of known and unknown user ids.
    sel = jax.random.randint(k_sel, (N,), 0, M_IDS)
    user_ids = jnp.asarray(all_user_ids, dtype=jnp.int32)[sel]
    unknown = jax.random.bernoulli(k_unk, 0.25, (N,))
    user_ids = jnp.where(unknown, jnp.int32(999_999), user_ids)

    out = encoder(user_ids)
    out = jax.block_until_ready(out)

    # Pure host reference mirroring the PyTorch forward exactly.
    C = encoder.get_embedding_length()
    default = len(encoder.mapping) + encoder.padding - 1
    ids_np = np.asarray(user_ids)
    ref_idx = np.array([encoder.mapping.get(int(u), default) for u in ids_np])
    ref = np.zeros((N, C), dtype=np.float32)
    ref[np.arange(N), ref_idx] = 1.0

    assert out.shape == (N, C), out.shape
    assert out.dtype == jnp.float32, out.dtype
    np.testing.assert_allclose(np.asarray(out), ref, rtol=0, atol=0)
    print("KERNEL_OK")
</pallas_src>

<mosaic_0001>
module attributes {stable_mosaic.version = 11 : i64} {
  func.func @_one_hot_kernel(%arg0: i32, %arg1: i32, %arg2: memref<32x1xi32, #tpu.memory_space<vmem>>, %arg3: memref<1x120xi32, #tpu.memory_space<vmem>>, %arg4: memref<1x120xi32, #tpu.memory_space<vmem>>, %arg5: memref<32x128xf32, #tpu.memory_space<vmem>>, %arg6: memref<32x1xi32, #tpu.memory_space<vmem>>) attributes {dimension_semantics = [#tpu.dimension_semantics<parallel>, #tpu.dimension_semantics<arbitrary>], iteration_bounds = array<i64: 2, 1>, scalar_prefetch = 0 : i64, scratch_operands = 1 : i64, tpu.core_type = #tpu.core_type<tc>, window_params = [{transform_indices = @transform_0, window_bounds = array<i64: 32, 1>}, {pipeline_mode = #tpu.pipeline_mode<synchronous>, transform_indices = @transform_1, window_bounds = array<i64: 1, 120>}, {pipeline_mode = #tpu.pipeline_mode<synchronous>, transform_indices = @transform_2, window_bounds = array<i64: 1, 120>}, {transform_indices = @transform_3, window_bounds = array<i64: 32, 128>}]} {
    %c0_i32 = arith.constant 0 : i32
    %0 = arith.cmpi eq, %arg1, %c0_i32 : i32
    %1 = arith.extui %0 : i1 to i32
    %c0_i32_0 = arith.constant 0 : i32
    %2 = arith.cmpi ne, %1, %c0_i32_0 : i32
    scf.if %2 {
      %c0_4 = arith.constant 0 : index
      %c0_5 = arith.constant 0 : index
      %13 = vector.load %arg2[%c0_4, %c0_5] : memref<32x1xi32, #tpu.memory_space<vmem>>, vector<32x1xi32>
      %c0_6 = arith.constant 0 : index
      %c0_7 = arith.constant 0 : index
      %14 = vector.load %arg3[%c0_6, %c0_7] : memref<1x120xi32, #tpu.memory_space<vmem>>, vector<1x120xi32>
      %c0_8 = arith.constant 0 : index
      %c0_9 = arith.constant 0 : index
      %15 = vector.load %arg4[%c0_8, %c0_9] : memref<1x120xi32, #tpu.memory_space<vmem>>, vector<1x120xi32>
      %16 = vector.broadcast %13 : vector<32x1xi32> to vector<32x120xi32>
      %17 = vector.broadcast %14 : vector<1x120xi32> to vector<32x120xi32>
      %18 = arith.cmpi eq, %16, %17 : vector<32x120xi32>
      %c-1_i32 = arith.constant -1 : i32
      %19 = vector.shape_cast %15 : vector<1x120xi32> to vector<1x120xi32>
      %20 = vector.broadcast %19 : vector<1x120xi32> to vector<32x120xi32>
      %21 = vector.broadcast %c-1_i32 : i32 to vector<32x120xi32>
      %22 = arith.select %18, %20, %21 : vector<32x120xi1>, vector<32x120xi32>
      %cst = arith.constant dense<-2147483648> : vector<32xi32>
      %23 = vector.multi_reduction <maxsi>, %22, %cst [1] : vector<32x120xi32> to vector<32xi32>
      %24 = vector.shape_cast %23 : vector<32xi32> to vector<32x1xi32>
      %c0_i32_10 = arith.constant 0 : i32
      %25 = vector.broadcast %c0_i32_10 : i32 to vector<32x1xi32>
      %26 = arith.cmpi sge, %24, %25 : vector<32x1xi32>
      %c127_i32 = arith.constant 127 : i32
      %27 = vector.broadcast %c127_i32 : i32 to vector<32x1xi32>
      %28 = arith.select %26, %24, %27 : vector<32x1xi1>, vector<32x1xi32>
      %c0_11 = arith.constant 0 : index
      %c0_12 = arith.constant 0 : index
      %29 = vector.load %arg6[%c0_11, %c0_12] : memref<32x1xi32, #tpu.memory_space<vmem>>, vector<32x1xi32>
      tpu.vector_store %arg6[%c0_11, %c0_12], %28 {strides = array<i32>} : memref<32x1xi32, #tpu.memory_space<vmem>>, vector<32x1xi32>,
    } else {
    }
    %c128_i32 = arith.constant 128 : i32
    %3 = arith.muli %arg1, %c128_i32 : i32
    %4 = tpu.iota {dimensions = array<i32: 1>} : vector<32x128xi32>
    %5 = vector.broadcast %3 : i32 to vector<32x128xi32>
    %6 = arith.addi %5, %4 : vector<32x128xi32>
    %c0 = arith.constant 0 : index
    %c0_1 = arith.constant 0 : index
    %7 = vector.load %arg6[%c0, %c0_1] : memref<32x1xi32, #tpu.memory_space<vmem>>, vector<32x1xi32>
    %8 = vector.broadcast %7 : vector<32x1xi32> to vector<32x128xi32>
    %9 = arith.cmpi eq, %6, %8 : vector<32x128xi32>
    %10 = arith.extui %9 : vector<32x128xi1> to vector<32x128xi32>
    %11 = arith.sitofp %10 : vector<32x128xi32> to vector<32x128xf32>
    %c0_2 = arith.constant 0 : index
    %c0_3 = arith.constant 0 : index
    %12 = vector.load %arg5[%c0_2, %c0_3] : memref<32x128xf32, #tpu.memory_space<vmem>>, vector<32x128xf32>
    tpu.vector_store %arg5[%c0_2, %c0_3], %11 {strides = array<i32>} : memref<32x128xf32, #tpu.memory_space<vmem>>, vector<32x128xf32>,
    return
  }
  func.func @transform_0(%arg0: i32, %arg1: i32) -> (i32, i32) {
    %c0_i32 = arith.constant 0 : i32
    %c0_i32_0 = arith.constant 0 : i32
    return %arg0, %c0_i32 : i32, i32
  }
  func.func @transform_1(%arg0: i32, %arg1: i32) -> (i32, i32) {
    %c0_i32 = arith.constant 0 : i32
    %c0_i32_0 = arith.constant 0 : i32
    %c0_i32_1 = arith.constant 0 : i32
    return %c0_i32, %c0_i32_0 : i32, i32
  }
  func.func @transform_2(%arg0: i32, %arg1: i32) -> (i32, i32) {
    %c0_i32 = arith.constant 0 : i32
    %c0_i32_0 = arith.constant 0 : i32
    %c0_i32_1 = arith.constant 0 : i32
    return %c0_i32, %c0_i32_0 : i32, i32
  }
  func.func @transform_3(%arg0: i32, %arg1: i32) -> (i32, i32) {
    %c0_i32 = arith.constant 0 : i32
    return %arg0, %arg1 : i32, i32
  }
}

module attributes {stable_mosaic.version = 11 : i64} {
  func.func @_one_hot_kernel(%arg0: i32, %arg1: i32, %arg2: memref<32x1xi32, #tpu.memory_space<vmem>>, %arg3: memref<1x120xi32, #tpu.memory_space<vmem>>, %arg4: memref<1x120xi32, #tpu.memory_space<vmem>>, %arg5: memref<32x128xf32, #tpu.memory_space<vmem>>, %arg6: memref<32x1xi32, #tpu.memory_space<vmem>>) attributes {dimension_semantics = [#tpu.dimension_semantics<parallel>, #tpu.dimension_semantics<arbitrary>], iteration_bounds = array<i64: 2, 1>, scalar_prefetch = 0 : i64, scratch_operands = 1 : i64, tpu.core_type = #tpu.core_type<tc>, window_params = [{transform_indices = @transform_0, window_bounds = array<i64: 32, 1>}, {pipeline_mode = #tpu.pipeline_mode<synchronous>, transform_indices = @transform_1, window_bounds = array<i64: 1, 120>}, {pipeline_mode = #tpu.pipeline_mode<synchronous>, transform_indices = @transform_2, window_bounds = array<i64: 1, 120>}, {transform_indices = @transform_3, window_bounds = array<i64: 32, 128>}]} {
    %c0_i32 = arith.constant 0 : i32
    %0 = arith.cmpi eq, %arg1, %c0_i32 : i32
    %1 = arith.extui %0 : i1 to i32
    %c0_i32_0 = arith.constant 0 : i32
    %2 = arith.cmpi ne, %1, %c0_i32_0 : i32
    scf.if %2 {
      %c0_4 = arith.constant 0 : index
      %c0_5 = arith.constant 0 : index
      %13 = vector.load %arg2[%c0_4, %c0_5] : memref<32x1xi32, #tpu.memory_space<vmem>>, vector<32x1xi32>
      %c0_6 = arith.constant 0 : index
      %c0_7 = arith.constant 0 : index
      %14 = vector.load %arg3[%c0_6, %c0_7] : memref<1x120xi32, #tpu.memory_space<vmem>>, vector<1x120xi32>
      %c0_8 = arith.constant 0 : index
      %c0_9 = arith.constant 0 : index
      %15 = vector.load %arg4[%c0_8, %c0_9] : memref<1x120xi32, #tpu.memory_space<vmem>>, vector<1x120xi32>
      %16 = vector.broadcast %13 : vector<32x1xi32> to vector<32x120xi32>
      %17 = vector.broadcast %14 : vector<1x120xi32> to vector<32x120xi32>
      %18 = arith.cmpi eq, %16, %17 : vector<32x120xi32>
      %c-1_i32 = arith.constant -1 : i32
      %19 = vector.shape_cast %15 : vector<1x120xi32> to vector<1x120xi32>
      %20 = vector.broadcast %19 : vector<1x120xi32> to vector<32x120xi32>
      %21 = vector.broadcast %c-1_i32 : i32 to vector<32x120xi32>
      %22 = arith.select %18, %20, %21 : vector<32x120xi1>, vector<32x120xi32>
      %cst = arith.constant dense<-2147483648> : vector<32xi32>
      %23 = vector.multi_reduction <maxsi>, %22, %cst [1] : vector<32x120xi32> to vector<32xi32>
      %24 = vector.shape_cast %23 : vector<32xi32> to vector<32x1xi32>
      %c0_i32_10 = arith.constant 0 : i32
      %25 = vector.broadcast %c0_i32_10 : i32 to vector<32x1xi32>
      %26 = arith.cmpi sge, %24, %25 : vector<32x1xi32>
      %c127_i32 = arith.constant 127 : i32
      %27 = vector.broadcast %c127_i32 : i32 to vector<32x1xi32>
      %28 = arith.select %26, %24, %27 : vector<32x1xi1>, vector<32x1xi32>
      %c0_11 = arith.constant 0 : index
      %c0_12 = arith.constant 0 : index
      %29 = vector.load %arg6[%c0_11, %c0_12] : memref<32x1xi32, #tpu.memory_space<vmem>>, vector<32x1xi32>
      tpu.vector_store %arg6[%c0_11, %c0_12], %28 {strides = array<i32>} : memref<32x1xi32, #tpu.memory_space<vmem>>, vector<32x1xi32>,
    } else {
    }
    %c128_i32 = arith.constant 128 : i32
    %3 = arith.muli %arg1, %c128_i32 : i32
    %4 = tpu.iota {dimensions = array<i32: 1>} : vector<32x128xi32>
    %5 = vector.broadcast %3 : i32 to vector<32x128xi32>
    %6 = arith.addi %5, %4 : vector<32x128xi32>
    %c0 = arith.constant 0 : index
    %c0_1 = arith.constant 0 : index
    %7 = vector.load %arg6[%c0, %c0_1] : memref<32x1xi32, #tpu.memory_space<vmem>>, vector<32x1xi32>
    %8 = vector.broadcast %7 : vector<32x1xi32> to vector<32x128xi32>
    %9 = arith.cmpi eq, %6, %8 : vector<32x128xi32>
    %10 = arith.extui %9 : vector<32x128xi1> to vector<32x128xi32>
    %11 = arith.sitofp %10 : vector<32x128xi32> to vector<32x128xf32>
    %c0_2 = arith.constant 0 : index
    %c0_3 = arith.constant 0 : index
    %12 = vector.load %arg5[%c0_2, %c0_3] : memref<32x128xf32, #tpu.memory_space<vmem>>, vector<32x128xf32>
    tpu.vector_store %arg5[%c0_2, %c0_3], %11 {strides = array<i32>} : memref<32x128xf32, #tpu.memory_space<vmem>>, vector<32x128xf32>,
    return
  }
  func.func @transform_0(%arg0: i32, %arg1: i32) -> (i32, i32) {
    %c0_i32 = arith.constant 0 : i32
    %c0_i32_0 = arith.constant 0 : i32
    return %arg0, %c0_i32 : i32, i32
  }
  func.func @transform_1(%arg0: i32, %arg1: i32) -> (i32, i32) {
    %c0_i32 = arith.constant 0 : i32
    %c0_i32_0 = arith.constant 0 : i32
    %c0_i32_1 = arith.constant 0 : i32
    return %c0_i32, %c0_i32_0 : i32, i32
  }
  func.func @transform_2(%arg0: i32, %arg1: i32) -> (i32, i32) {
    %c0_i32 = arith.constant 0 : i32
    %c0_i32_0 = arith.constant 0 : i32
    %c0_i32_1 = arith.constant 0 : i32
    return %c0_i32, %c0_i32_0 : i32, i32
  }
  func.func @transform_3(%arg0: i32, %arg1: i32) -> (i32, i32) {
    %c0_i32 = arith.constant 0 : i32
    return %arg0, %arg1 : i32, i32
  }
}

</mosaic_0001>

<llo_original>
// kernel: tpu_custom_call.1
$region0: #{tpu_custom_call.1}
  #allocation0 [shape = 'u32[]', space=smem, size = 0x4, offset = 0x4, fixed_abs, tag = 'smem constant byte address 0x4 - core index']
  #allocation1 [shape = 'u32[144,128]{1,0:T(1,128)}', space=vmem, size = 0x12000, scoped, tag = 'internal scratch']
  #allocation2 [shape = 's32[32,1]{1,0:T(8,128)}', space=vmem, size = 0x4000, scoped, tag = 'scratch operand']
  %s0 = inlined_call_operand.vmem [shape: s32[64,1], index: 0, kind: input, shape index: {}]
  %s1 = inlined_call_operand.vmem [shape: s32[1,120], index: 1, kind: input, shape index: {}]
  %s2 = inlined_call_operand.vmem [shape: s32[1,120], index: 2, kind: input, shape index: {}]
  %s3 = inlined_call_operand.hbm [shape: f32[64,128], index: 3, kind: output, shape index: {}]
  %s4 = sld [smem:[#allocation0]]
  $region49: #{tpu_custom_call.1} parent=0
    _
  %s6 = ssub.s32 1, %s4
  %s7 = scalar_select 0, %s6, %s4
  $region1: #{tpu_custom_call.1} parent=0
    #allocation3 [shape = 'u8[32768]{0}', space=vmem, size = 0x8000, scoped, tag = 'output window, operand 0']
    #allocation4 [shape = 's32[2]{0}', space=sflag, size = 0x8, scoped, tag = 'scoped memory for tpu_custom_call.1']
    %8 = vsyncpa [#allocation4], 0
    %s9 = scalar_lea.sflag [#allocation4], 1
    %10 = vsyncpa %s9, 0
    loop: start=0, step=1, limit=4
    $region2: #{tpu_custom_call.1} parent=1 // loop_pre_header
      _
    $region3: #{tpu_custom_call.1} parent=1 // loop_header
      %s12 = sphi 0, %s16
      %p13 = scmp.ge.s32.totalorder %s12, 4
      %s19 = sphi 0, %s31
      %s20 = sphi 0, %s27
      %s21 = sphi 0, %s19
      %s22 = sphi 0, %s20
      %s23 = sphi 0, %s21
      %s24 = sphi 0, %s22
      %s34 = sphi 0, %s36
      %s37 = sphi 0, %s34
      %s38 = sphi 0, %s37
      %s54 = sphi 0, %s38
      %s58 = sphi 0, %s58
      %s60 = sphi 0, %s58
      %s61 = sphi 0, %s60
      %s75 = sphi 0, %s61
      %s79 = sphi 0, %s79
      %s81 = sphi 0, %s79
      %s82 = sphi 0, %s81
      %s96 = sphi 0, %s82
      %s104 = sphi 0, %s106
      %s107 = sphi 0, %s104
      %s108 = sphi 0, %s107
      %s124 = sphi 0, %s108
    $region4: #{tpu_custom_call.1} parent=1 // loop_header_branch
      %15 = sbr.rel (%p13) target = $region8
    $region5: #{tpu_custom_call.1} parent=1 // loop_body
      %s17 = ssub.s32 %s12, 1
      %s18 = ssub.s32 %s12, 2
      %s25 = sadd.s32 1, %s20
      %p26 = scmp.ge.s32.totalorder %s25, 1
      %s27 = scalar_select %p26, 0, %s25
      %s28 = sadd.s32 1, %s19
      %s29 = scalar_select %p26, %s28, %s19
      %p30 = scmp.ge.s32.totalorder %s29, 2
      %s31 = scalar_select %p30, 0, %s29
      %s32 = ssub.s32 %s19, %s31
      %p33 = scmp.eq.s32.totalorder %s32, 0
      %s35 = sadd.s32 %s34, 1
      %s36 = scalar_select %p33, %s34, %s35
      %p39 = pneg %p33
      %p40 = scmp.eq.s32.totalorder %s12, 1
      %p41 = por %p39, %p40
      %p42 = scmp.ne.s32.totalorder %s34, %s37
      %p43 = scmp.eq.s32.totalorder %s12, 0
      %p44 = por %p42, %p43
      %p45 = scmp.ne.s32.totalorder %s34, %s37
      %p46 = scmp.eq.s32.totalorder %s17, 1
      %p47 = por %p45, %p46
      %p48 = scmp.ne.s32.totalorder %s37, %s38
      %p49 = scmp.eq.s32.totalorder %s17, 0
      %p50 = por %p48, %p49
      %p51 = scmp.ne.s32.totalorder %s37, %s38
      %p52 = scmp.eq.s32.totalorder %s18, 1
      %p53 = por %p51, %p52
      %p55 = scmp.ne.s32.totalorder %s38, %s54
      %p56 = scmp.eq.s32.totalorder %s18, 0
      %p57 = por %p55, %p56
      %s59 = sadd.s32 %s58, 1
      %p62 = scmp.eq.s32.totalorder %s12, 1
      %p63 = scmp.ne.s32.totalorder %s58, %s60
      %p64 = scmp.eq.s32.totalorder %s12, 0
      %p65 = por %p63, %p64
      %p66 = scmp.ne.s32.totalorder %s58, %s60
      %p67 = scmp.eq.s32.totalorder %s17, 1
      %p68 = por %p66, %p67
      %p69 = scmp.ne.s32.totalorder %s60, %s61
      %p70 = scmp.eq.s32.totalorder %s17, 0
      %p71 = por %p69, %p70
      %p72 = scmp.ne.s32.totalorder %s60, %s61
      %p73 = scmp.eq.s32.totalorder %s18, 1
      %p74 = por %p72, %p73
      %p76 = scmp.ne.s32.totalorder %s61, %s75
      %p77 = scmp.eq.s32.totalorder %s18, 0
      %p78 = por %p76, %p77
      %s80 = sadd.s32 %s79, 1
      %p83 = scmp.eq.s32.totalorder %s12, 1
      %p84 = scmp.ne.s32.totalorder %s79, %s81
      %p85 = scmp.eq.s32.totalorder %s12, 0
      %p86 = por %p84, %p85
      %p87 = scmp.ne.s32.totalorder %s79, %s81
      %p88 = scmp.eq.s32.totalorder %s17, 1
      %p89 = por %p87, %p88
      %p90 = scmp.ne.s32.totalorder %s81, %s82
      %p91 = scmp.eq.s32.totalorder %s17, 0
      %p92 = por %p90, %p91
      %p93 = scmp.ne.s32.totalorder %s81, %s82
      %p94 = scmp.eq.s32.totalorder %s18, 1
      %p95 = por %p93, %p94
      %p97 = scmp.ne.s32.totalorder %s82, %s96
      %p98 = scmp.eq.s32.totalorder %s18, 0
      %p99 = por %p97, %p98
      %s100 = ssub.s32 %s19, %s31
      %s101 = ssub.s32 %s20, %s27
      %s102 = sor.u32 %s100, %s101
      %p103 = scmp.eq.s32.totalorder %s102, 0
      %s105 = sadd.s32 %s104, 1
      %s106 = scalar_select %p103, %s104, %s105
      %p109 = pneg %p103
      %p110 = scmp.eq.s32.totalorder %s12, 1
      %p111 = por %p109, %p110
      %p112 = scmp.ne.s32.totalorder %s104, %s107
      %p113 = scmp.eq.s32.totalorder %s12, 0
      %p114 = por %p112, %p113
      %p115 = scmp.ne.s32.totalorder %s104, %s107
      %p116 = scmp.eq.s32.totalorder %s17, 1
      %p117 = por %p115, %p116
      %p118 = scmp.ne.s32.totalorder %s107, %s108
      %p119 = scmp.eq.s32.totalorder %s17, 0
      %p120 = por %p118, %p119
      %p121 = scmp.ne.s32.totalorder %s107, %s108
      %p122 = scmp.eq.s32.totalorder %s18, 1
      %p123 = por %p121, %p122
      %p125 = scmp.ne.s32.totalorder %s108, %s124
      %p126 = scmp.eq.s32.totalorder %s18, 0
      %p127 = por %p125, %p126
      %p128 = scmp.le.s32.totalorder 1, %s12
      %p129 = scmp.lt.s32.totalorder %s12, 3
      %p130 = pnand %p128, %p129
      %p131 = pneg %p130
      // Predicated region
      $region9: #{tpu_custom_call.1} parent=5 // pred_check
        _
      $region10: #{tpu_custom_call.1} parent=5 // pred_check_branch
        %133 = sbr.rel (%p130) target = $region12
      $region11: #{tpu_custom_call.1} parent=5 // pred_region
        %s134 = ssub.s32 %s12, 1
        // Predicated region
        $region13: #{tpu_custom_call.1} parent=11 // pred_check
          %p135 = pneg %p71
        $region14: #{tpu_custom_call.1} parent=11 // pred_check_branch
          %137 = sbr.rel (%p135) target = $region16
        $region15: #{tpu_custom_call.1} parent=11 // pred_region
          _
        $region16: #{tpu_custom_call.1} parent=11 // pred_fallthru
          _
        // Predicated region
        $region17: #{tpu_custom_call.1} parent=11 // pred_check
          %p138 = pneg %p92
        $region18: #{tpu_custom_call.1} parent=11 // pred_check_branch
          %140 = sbr.rel (%p138) target = $region20
        $region19: #{tpu_custom_call.1} parent=11 // pred_region
          _
        $region20: #{tpu_custom_call.1} parent=11 // pred_fallthru
          _
      $region12: #{tpu_custom_call.1} parent=5 // pred_fallthru
        _
      %p141 = scmp.lt.s32.totalorder %s12, 2
      // Predicated region
      $region21: #{tpu_custom_call.1} parent=5 // pred_check
        %p142 = pneg %p141
      $region22: #{tpu_custom_call.1} parent=5 // pred_check_branch
        %144 = sbr.rel (%p142) target = $region24
      $region23: #{tpu_custom_call.1} parent=5 // pred_region
        // Predicated region
        $region25: #{tpu_custom_call.1} parent=23 // pred_check
          %p145 = pneg %p44
        $region26: #{tpu_custom_call.1} parent=23 // pred_check_branch
          %147 = sbr.rel (%p145) target = $region28
        $region27: #{tpu_custom_call.1} parent=23 // pred_region
          %s148 = smul.u32 4, %s19
          %p149 = scmp.lt.s32.totalorder %s148, 7
          %s150 = scalar_select %p149, %s148, 7
          %s151 = smul.addr %s150, 8
          %s152 = scalar_lea.vmem %s0, %s151
          %s153 = smul.u32 4, %s19
        $region28: #{tpu_custom_call.1} parent=23 // pred_fallthru
          _
      $region24: #{tpu_custom_call.1} parent=5 // pred_fallthru
        _
      %p154 = scmp.le.s32.totalorder 1, %s12
      %p155 = scmp.lt.s32.totalorder %s12, 3
      %p156 = pnand %p154, %p155
      %p157 = pneg %p156
      // Predicated region
      $region29: #{tpu_custom_call.1} parent=5 // pred_check
        _
      $region30: #{tpu_custom_call.1} parent=5 // pred_check_branch
        %159 = sbr.rel (%p156) target = $region32
      $region31: #{tpu_custom_call.1} parent=5 // pred_region
        %s160 = ssub.s32 %s12, 1
        %s161 = smul.u32 4, %s21
        %p162 = scmp.lt.s32.totalorder %s161, 7
        %s163 = scalar_select %p162, %s161, 7
        %s164 = smul.addr %s163, 8
        %s165 = scalar_lea.vmem %s0, %s164
        %p166 = pneg %p50
        %p167 = pneg %p47
        %p168 = pneg %p71
        %p169 = pneg %p68
        %p170 = pneg %p92
        %p171 = pneg %p89
        %p172 = pneg %p120
        %p173 = pneg %p117
        %s174 = sand.u32 %s107, 1
        %s175 = scalar_lea.sflag [#allocation4], %s174
        %s176 = sand.u32 %s107, 1
        %s177 = smul.addr %s176, 32
        %s178 = scalar_lea.vmem [#allocation3], %s177
        %s179 = smul.u32 4, %s21
        %p180 = scmp.lt.s32.totalorder %s179, 7
        %s181 = scalar_select %p180, %s179, 7
        %s182 = smul.addr %s181, 8
        %s183 = scalar_lea.vmem %s0, %s182
        %s184 = smul.u32 4, %s21
        %s185 = smul.u32 4, %s21
        %p186 = scmp.eq.s32.totalorder %s22, 0
        // Predicated region
        $region33: #{tpu_custom_call.1} parent=31 // pred_check
          %p187 = pneg %p186
        $region34: #{tpu_custom_call.1} parent=31 // pred_check_branch
          %189 = sbr.rel (%p187) target = $region36
        $region35: #{tpu_custom_call.1} parent=31 // pred_region
          %v190 = vld [vmem:[%s183] sm:$0xff]
          %v191 = vld [vmem:[%s183 + $0x8] sm:$0xff]
          %v192 = vld [vmem:[%s183 + $0x10] sm:$0xff]
          %v193 = vld [vmem:[%s183 + $0x18] sm:$0xff]
          %v194 = vld [vmem:[%s1] sm:$0x1]
          %v195 = vld [vmem:[%s2] sm:$0x1]
          %196 = vset.pattern.permute.xlu0 0
          %197 = vperm.xlu0 %196, %v190
          %v198 = vpop.permute.xlu0 %197
          %199 = vset.pattern.permute.xlu0 0
          %200 = vperm.xlu0 %199, %v191
          %v201 = vpop.permute.xlu0 %200
          %202 = vset.pattern.permute.xlu0 0
          %203 = vperm.xlu0 %202, %v192
          %v204 = vpop.permute.xlu0 %203
          %205 = vset.pattern.permute.xlu0 0
          %206 = vperm.xlu0 %205, %v193
          %v207 = vpop.permute.xlu0 %206
          %v208 = vlaneseq
          %v209 = vshrl.u32 %v208, 7
          %v210 = vsub.s32 0, %v209
          %v211 = vrot.slane %v194, %v210
          %vm212 = vcmp.eq.s32.totalorder %v198, %v211
          %vm213 = vcmp.eq.s32.totalorder %v201, %v211
          %vm214 = vcmp.eq.s32.totalorder %v204, %v211
          %vm215 = vcmp.eq.s32.totalorder %v207, %v211
          %v216 = vlaneseq
          %v217 = vshrl.u32 %v216, 7
          %v218 = vsub.s32 0, %v217
          %v219 = vrot.slane %v195, %v218
          %v220 = vsel %vm212, %v219, 4294967295
          %v221 = vsel %vm213, %v219, 4294967295
          %v222 = vsel %vm214, %v219, 4294967295
          %v223 = vsel %vm215, %v219, 4294967295
          %vm224 = vcmask 982016
          %v225 = vsel %vm224, %v220, 2147483648
          %v226 = vand.u32 %v225, 65535
          %v227 = vshra.s32 %v225, 16
          %v228 = vcvt.s32.f32 %v226
          %v229 = vcvt.s32.f32 %v227
          %230 = vmax.xlane.f32.xlu0 %v229
          %v231 = vpop.xlane.xlu0 %230
          %vm232 = vcmp.eq.f32.partialorder %v229, %v231
          %v233 = vsel %vm232, %v228, -inf
          %234 = vmax.xlane.f32.xlu0 %v233
          %v235 = vpop.xlane.xlu0 %234
          %v236 = vcvt.f32.s32 %v235
          %v237 = vcvt.f32.s32 %v231
          %v238 = vshll.u32 %v237, 16
          %v239 = vadd.s32 %v238, %v236
          %v240 = vsel %vm224, %v221, 2147483648
          %v241 = vand.u32 %v240, 65535
          %v242 = vshra.s32 %v240, 16
          %v243 = vcvt.s32.f32 %v241
          %v244 = vcvt.s32.f32 %v242
          %245 = vmax.xlane.f32.xlu0 %v244
          %v246 = vpop.xlane.xlu0 %245
          %vm247 = vcmp.eq.f32.partialorder %v244, %v246
          %v248 = vsel %vm247, %v243, -inf
          %249 = vmax.xlane.f32.xlu0 %v248
          %v250 = vpop.xlane.xlu0 %249
          %v251 = vcvt.f32.s32 %v250
          %v252 = vcvt.f32.s32 %v246
          %v253 = vshll.u32 %v252, 16
          %v254 = vadd.s32 %v253, %v251
          %v255 = vsel %vm224, %v222, 2147483648
          %v256 = vand.u32 %v255, 65535
          %v257 = vshra.s32 %v255, 16
          %v258 = vcvt.s32.f32 %v256
          %v259 = vcvt.s32.f32 %v257
          %260 = vmax.xlane.f32.xlu0 %v259
          %v261 = vpop.xlane.xlu0 %260
          %vm262 = vcmp.eq.f32.partialorder %v259, %v261
          %v263 = vsel %vm262, %v258, -inf
          %264 = vmax.xlane.f32.xlu0 %v263
          %v265 = vpop.xlane.xlu0 %264
          %v266 = vcvt.f32.s32 %v265
          %v267 = vcvt.f32.s32 %v261
          %v268 = vshll.u32 %v267, 16
          %v269 = vadd.s32 %v268, %v266
          %v270 = vsel %vm224, %v223, 2147483648
          %v271 = vand.u32 %v270, 65535
          %v272 = vshra.s32 %v270, 16
          %v273 = vcvt.s32.f32 %v271
          %v274 = vcvt.s32.f32 %v272
          %275 = vmax.xlane.f32.xlu0 %v274
          %v276 = vpop.xlane.xlu0 %275
          %vm277 = vcmp.eq.f32.partialorder %v274, %v276
          %v278 = vsel %vm277, %v273, -inf
          %279 = vmax.xlane.f32.xlu0 %v278
          %v280 = vpop.xlane.xlu0 %279
          %v281 = vcvt.f32.s32 %v280
          %v282 = vcvt.f32.s32 %v276
          %v283 = vshll.u32 %v282, 16
          %v284 = vadd.s32 %v283, %v281
          %vm285 = vcmp.ge.s32.totalorder %v239, 0
          %vm286 = vcmp.ge.s32.totalorder %v254, 0
          %vm287 = vcmp.ge.s32.totalorder %v269, 0
          %vm288 = vcmp.ge.s32.totalorder %v284, 0
          %v289 = vsel %vm285, %v239, 127
          %v290 = vsel %vm286, %v254, 127
          %v291 = vsel %vm287, %v269, 127
          %v292 = vsel %vm288, %v284, 127
          %vm293 = vcmask 7168
          %294 = vst.msk [vmem:[#allocation2] sm:$0xff] %vm293, %v289
          %295 = vst.msk [vmem:[#allocation2 + $0x8] sm:$0xff] %vm293, %v290
          %296 = vst.msk [vmem:[#allocation2 + $0x10] sm:$0xff] %vm293, %v291
          %297 = vst.msk [vmem:[#allocation2 + $0x18] sm:$0xff] %vm293, %v292
        $region36: #{tpu_custom_call.1} parent=31 // pred_fallthru
          _
        %s298 = smul.u32 %s22, 128
        %v299 = vlaneseq
        %v300 = vand.u32 %v299, 127
        %v301 = vstv %s298
        %v302 = vadd.s32 %v301, %v300
        %v303 = vld [vmem:[#allocation2] sm:$0xff]
        %v304 = vld [vmem:[#allocation2 + $0x8] sm:$0xff]
        %v305 = vld [vmem:[#allocation2 + $0x10] sm:$0xff]
        %v306 = vld [vmem:[#allocation2 + $0x18] sm:$0xff]
        %307 = vset.pattern.permute.xlu0 0
        %308 = vperm.xlu0 %307, %v303
        %v309 = vpop.permute.xlu0 %308
        %310 = vset.pattern.permute.xlu0 0
        %311 = vperm.xlu0 %310, %v304
        %v312 = vpop.permute.xlu0 %311
        %313 = vset.pattern.permute.xlu0 0
        %314 = vperm.xlu0 %313, %v305
        %v315 = vpop.permute.xlu0 %314
        %316 = vset.pattern.permute.xlu0 0
        %317 = vperm.xlu0 %316, %v306
        %v318 = vpop.permute.xlu0 %317
        %vm319 = vcmp.eq.s32.totalorder %v302, %v309
        %vm320 = vcmp.eq.s32.totalorder %v302, %v312
        %vm321 = vcmp.eq.s32.totalorder %v302, %v315
        %vm322 = vcmp.eq.s32.totalorder %v302, %v318
        %v323 = vsel %vm319, 1, 0
        %v324 = vsel %vm320, 1, 0
        %v325 = vsel %vm321, 1, 0
        %v326 = vsel %vm322, 1, 0
        %v327 = vcvt.s32.f32 %v323
        %v328 = vcvt.s32.f32 %v324
        %v329 = vcvt.s32.f32 %v325
        %v330 = vcvt.s32.f32 %v326
        %331 = vst [vmem:[%s178] sm:$0xff] %v327
        %332 = vst [vmem:[%s178 + $0x8] sm:$0xff] %v328
        %333 = vst [vmem:[%s178 + $0x10] sm:$0xff] %v329
        %334 = vst [vmem:[%s178 + $0x18] sm:$0xff] %v330
        %s335 = sand.u32 %s107, 1
        %s336 = scalar_lea.sflag [#allocation4], %s335
        %s337 = sand.u32 %s107, 1
        %s338 = smul.addr %s337, 32
        %s339 = scalar_lea.vmem [#allocation3], %s338
        // Predicated region
        $region37: #{tpu_custom_call.1} parent=31 // pred_check
          %p340 = pneg %p117
        $region38: #{tpu_custom_call.1} parent=31 // pred_check_branch
          %342 = sbr.rel (%p340) target = $region40
        $region39: #{tpu_custom_call.1} parent=31 // pred_region
          %s343 = smul.u32 4, %s21
          %s345 = ssub.s32 512, 512
          %346 = vsyncadd %s336, %s345
          %s347 = sadd.s32 %s22, %s343
          %s348 = smul.addr %s347, 128
          %s349 = scalar_lea.hbm %s3, %s348
          %s350 = sshll.u32 %s339, 4
          %s351 = int_to_ptr.vmem [resolvable:$true] %s350
          %356 = dma.vmem_to_hbm [thread:$0]  %s351, 512, %s349, %s336, 128, 128, 8
        $region40: #{tpu_custom_call.1} parent=31 // pred_fallthru
          _
      $region32: #{tpu_custom_call.1} parent=5 // pred_fallthru
        _
      %p357 = scmp.le.s32.totalorder 2, %s12
      // Predicated region
      $region41: #{tpu_custom_call.1} parent=5 // pred_check
        %p358 = pneg %p357
      $region42: #{tpu_custom_call.1} parent=5 // pred_check_branch
        %360 = sbr.rel (%p358) target = $region44
      $region43: #{tpu_custom_call.1} parent=5 // pred_region
        %s361 = ssub.s32 %s12, 2
        // Predicated region
        $region45: #{tpu_custom_call.1} parent=43 // pred_check
          %p362 = pneg %p123
        $region46: #{tpu_custom_call.1} parent=43 // pred_check_branch
          %364 = sbr.rel (%p362) target = $region48
        $region47: #{tpu_custom_call.1} parent=43 // pred_region
          %s365 = sand.u32 %s108, 1
          %s366 = scalar_lea.sflag [#allocation4], %s365
          %s367 = sand.u32 %s108, 1
          %s368 = smul.addr %s367, 32
          %s369 = scalar_lea.vmem [#allocation3], %s368
          %370 = dma.done %s366, 512
        $region48: #{tpu_custom_call.1} parent=43 // pred_fallthru
          _
      $region44: #{tpu_custom_call.1} parent=5 // pred_fallthru
        _
    $region6: #{tpu_custom_call.1} parent=1 // loop_footer
      %s16 = sadd.s32 1, %s12
    $region7: #{tpu_custom_call.1} parent=1 // loop_footer_branch
      %11 = sbr.rel target = $region3
    $region8: #{tpu_custom_call.1} parent=1 // loop_exit
      _
    %371 = vsyncpa [#allocation4], 1
    %s372 = scalar_lea.sflag [#allocation4], 1
    %373 = vsyncpa %s372, 1

// kernel: tpu_custom_call.1
$region0: #{tpu_custom_call.1}
  #allocation0 [shape = 'u32[]', space=smem, size = 0x4, offset = 0x4, fixed_abs, tag = 'smem constant byte address 0x4 - core index']
  #allocation1 [shape = 'u32[144,128]{1,0:T(1,128)}', space=vmem, size = 0x12000, scoped, tag = 'internal scratch']
  #allocation2 [shape = 's32[32,1]{1,0:T(8,128)}', space=vmem, size = 0x4000, scoped, tag = 'scratch operand']
  %s0 = inlined_call_operand.vmem [shape: s32[64,1], index: 0, kind: input, shape index: {}]
  %s1 = inlined_call_operand.vmem [shape: s32[1,120], index: 1, kind: input, shape index: {}]
  %s2 = inlined_call_operand.vmem [shape: s32[1,120], index: 2, kind: input, shape index: {}]
  %s3 = inlined_call_operand.hbm [shape: f32[64,128], index: 3, kind: output, shape index: {}]
  %s4 = sld [smem:[#allocation0]]
  $region49: #{tpu_custom_call.1} parent=0
    _
  %s6 = ssub.s32 1, %s4
  %s7 = scalar_select 0, %s6, %s4
  $region1: #{tpu_custom_call.1} parent=0
    #allocation3 [shape = 'u8[32768]{0}', space=vmem, size = 0x8000, scoped, tag = 'output window, operand 0']
    #allocation4 [shape = 's32[2]{0}', space=sflag, size = 0x8, scoped, tag = 'scoped memory for tpu_custom_call.1']
    %8 = vsyncpa [#allocation4], 0
    %s9 = scalar_lea.sflag [#allocation4], 1
    %10 = vsyncpa %s9, 0
    loop: start=0, step=1, limit=4
    $region2: #{tpu_custom_call.1} parent=1 // loop_pre_header
      _
    $region3: #{tpu_custom_call.1} parent=1 // loop_header
      %s12 = sphi 0, %s16
      %p13 = scmp.ge.s32.totalorder %s12, 4
      %s19 = sphi 0, %s31
      %s20 = sphi 0, %s27
      %s21 = sphi 0, %s19
      %s22 = sphi 0, %s20
      %s23 = sphi 0, %s21
      %s24 = sphi 0, %s22
      %s34 = sphi 0, %s36
      %s37 = sphi 0, %s34
      %s38 = sphi 0, %s37
      %s54 = sphi 0, %s38
      %s58 = sphi 0, %s58
      %s60 = sphi 0, %s58
      %s61 = sphi 0, %s60
      %s75 = sphi 0, %s61
      %s79 = sphi 0, %s79
      %s81 = sphi 0, %s79
      %s82 = sphi 0, %s81
      %s96 = sphi 0, %s82
      %s104 = sphi 0, %s106
      %s107 = sphi 0, %s104
      %s108 = sphi 0, %s107
      %s124 = sphi 0, %s108
    $region4: #{tpu_custom_call.1} parent=1 // loop_header_branch
      %15 = sbr.rel (%p13) target = $region8
    $region5: #{tpu_custom_call.1} parent=1 // loop_body
      %s17 = ssub.s32 %s12, 1
      %s18 = ssub.s32 %s12, 2
      %s25 = sadd.s32 1, %s20
      %p26 = scmp.ge.s32.totalorder %s25, 1
      %s27 = scalar_select %p26, 0, %s25
      %s28 = sadd.s32 1, %s19
      %s29 = scalar_select %p26, %s28, %s19
      %p30 = scmp.ge.s32.totalorder %s29, 2
      %s31 = scalar_select %p30, 0, %s29
      %s32 = ssub.s32 %s19, %s31
      %p33 = scmp.eq.s32.totalorder %s32, 0
      %s35 = sadd.s32 %s34, 1
      %s36 = scalar_select %p33, %s34, %s35
      %p39 = pneg %p33
      %p40 = scmp.eq.s32.totalorder %s12, 1
      %p41 = por %p39, %p40
      %p42 = scmp.ne.s32.totalorder %s34, %s37
      %p43 = scmp.eq.s32.totalorder %s12, 0
      %p44 = por %p42, %p43
      %p45 = scmp.ne.s32.totalorder %s34, %s37
      %p46 = scmp.eq.s32.totalorder %s17, 1
      %p47 = por %p45, %p46
      %p48 = scmp.ne.s32.totalorder %s37, %s38
      %p49 = scmp.eq.s32.totalorder %s17, 0
      %p50 = por %p48, %p49
      %p51 = scmp.ne.s32.totalorder %s37, %s38
      %p52 = scmp.eq.s32.totalorder %s18, 1
      %p53 = por %p51, %p52
      %p55 = scmp.ne.s32.totalorder %s38, %s54
      %p56 = scmp.eq.s32.totalorder %s18, 0
      %p57 = por %p55, %p56
      %s59 = sadd.s32 %s58, 1
      %p62 = scmp.eq.s32.totalorder %s12, 1
      %p63 = scmp.ne.s32.totalorder %s58, %s60
      %p64 = scmp.eq.s32.totalorder %s12, 0
      %p65 = por %p63, %p64
      %p66 = scmp.ne.s32.totalorder %s58, %s60
      %p67 = scmp.eq.s32.totalorder %s17, 1
      %p68 = por %p66, %p67
      %p69 = scmp.ne.s32.totalorder %s60, %s61
      %p70 = scmp.eq.s32.totalorder %s17, 0
      %p71 = por %p69, %p70
      %p72 = scmp.ne.s32.totalorder %s60, %s61
      %p73 = scmp.eq.s32.totalorder %s18, 1
      %p74 = por %p72, %p73
      %p76 = scmp.ne.s32.totalorder %s61, %s75
      %p77 = scmp.eq.s32.totalorder %s18, 0
      %p78 = por %p76, %p77
      %s80 = sadd.s32 %s79, 1
      %p83 = scmp.eq.s32.totalorder %s12, 1
      %p84 = scmp.ne.s32.totalorder %s79, %s81
      %p85 = scmp.eq.s32.totalorder %s12, 0
      %p86 = por %p84, %p85
      %p87 = scmp.ne.s32.totalorder %s79, %s81
      %p88 = scmp.eq.s32.totalorder %s17, 1
      %p89 = por %p87, %p88
      %p90 = scmp.ne.s32.totalorder %s81, %s82
      %p91 = scmp.eq.s32.totalorder %s17, 0
      %p92 = por %p90, %p91
      %p93 = scmp.ne.s32.totalorder %s81, %s82
      %p94 = scmp.eq.s32.totalorder %s18, 1
      %p95 = por %p93, %p94
      %p97 = scmp.ne.s32.totalorder %s82, %s96
      %p98 = scmp.eq.s32.totalorder %s18, 0
      %p99 = por %p97, %p98
      %s100 = ssub.s32 %s19, %s31
      %s101 = ssub.s32 %s20, %s27
      %s102 = sor.u32 %s100, %s101
      %p103 = scmp.eq.s32.totalorder %s102, 0
      %s105 = sadd.s32 %s104, 1
      %s106 = scalar_select %p103, %s104, %s105
      %p109 = pneg %p103
      %p110 = scmp.eq.s32.totalorder %s12, 1
      %p111 = por %p109, %p110
      %p112 = scmp.ne.s32.totalorder %s104, %s107
      %p113 = scmp.eq.s32.totalorder %s12, 0
      %p114 = por %p112, %p113
      %p115 = scmp.ne.s32.totalorder %s104, %s107
      %p116 = scmp.eq.s32.totalorder %s17, 1
      %p117 = por %p115, %p116
      %p118 = scmp.ne.s32.totalorder %s107, %s108
      %p119 = scmp.eq.s32.totalorder %s17, 0
      %p120 = por %p118, %p119
      %p121 = scmp.ne.s32.totalorder %s107, %s108
      %p122 = scmp.eq.s32.totalorder %s18, 1
      %p123 = por %p121, %p122
      %p125 = scmp.ne.s32.totalorder %s108, %s124
      %p126 = scmp.eq.s32.totalorder %s18, 0
      %p127 = por %p125, %p126
      %p128 = scmp.le.s32.totalorder 1, %s12
      %p129 = scmp.lt.s32.totalorder %s12, 3
      %p130 = pnand %p128, %p129
      %p131 = pneg %p130
      // Predicated region
      $region9: #{tpu_custom_call.1} parent=5 // pred_check
        _
      $region10: #{tpu_custom_call.1} parent=5 // pred_check_branch
        %133 = sbr.rel (%p130) target = $region12
      $region11: #{tpu_custom_call.1} parent=5 // pred_region
        %s134 = ssub.s32 %s12, 1
        // Predicated region
        $region13: #{tpu_custom_call.1} parent=11 // pred_check
          %p135 = pneg %p71
        $region14: #{tpu_custom_call.1} parent=11 // pred_check_branch
          %137 = sbr.rel (%p135) target = $region16
        $region15: #{tpu_custom_call.1} parent=11 // pred_region
          _
        $region16: #{tpu_custom_call.1} parent=11 // pred_fallthru
          _
        // Predicated region
        $region17: #{tpu_custom_call.1} parent=11 // pred_check
          %p138 = pneg %p92
        $region18: #{tpu_custom_call.1} parent=11 // pred_check_branch
          %140 = sbr.rel (%p138) target = $region20
        $region19: #{tpu_custom_call.1} parent=11 // pred_region
          _
        $region20: #{tpu_custom_call.1} parent=11 // pred_fallthru
          _
      $region12: #{tpu_custom_call.1} parent=5 // pred_fallthru
        _
      %p141 = scmp.lt.s32.totalorder %s12, 2
      // Predicated region
      $region21: #{tpu_custom_call.1} parent=5 // pred_check
        %p142 = pneg %p141
      $region22: #{tpu_custom_call.1} parent=5 // pred_check_branch
        %144 = sbr.rel (%p142) target = $region24
      $region23: #{tpu_custom_call.1} parent=5 // pred_region
        // Predicated region
        $region25: #{tpu_custom_call.1} parent=23 // pred_check
          %p145 = pneg %p44
        $region26: #{tpu_custom_call.1} parent=23 // pred_check_branch
          %147 = sbr.rel (%p145) target = $region28
        $region27: #{tpu_custom_call.1} parent=23 // pred_region
          %s148 = smul.u32 4, %s19
          %p149 = scmp.lt.s32.totalorder %s148, 7
          %s150 = scalar_select %p149, %s148, 7
          %s151 = smul.addr %s150, 8
          %s152 = scalar_lea.vmem %s0, %s151
          %s153 = smul.u32 4, %s19
        $region28: #{tpu_custom_call.1} parent=23 // pred_fallthru
          _
      $region24: #{tpu_custom_call.1} parent=5 // pred_fallthru
        _
      %p154 = scmp.le.s32.totalorder 1, %s12
      %p155 = scmp.lt.s32.totalorder %s12, 3
      %p156 = pnand %p154, %p155
      %p157 = pneg %p156
      // Predicated region
      $region29: #{tpu_custom_call.1} parent=5 // pred_check
        _
      $region30: #{tpu_custom_call.1} parent=5 // pred_check_branch
        %159 = sbr.rel (%p156) target = $region32
      $region31: #{tpu_custom_call.1} parent=5 // pred_region
        %s160 = ssub.s32 %s12, 1
        %s161 = smul.u32 4, %s21
        %p162 = scmp.lt.s32.totalorder %s161, 7
        %s163 = scalar_select %p162, %s161, 7
        %s164 = smul.addr %s163, 8
        %s165 = scalar_lea.vmem %s0, %s164
        %p166 = pneg %p50
        %p167 = pneg %p47
        %p168 = pneg %p71
        %p169 = pneg %p68
        %p170 = pneg %p92
        %p171 = pneg %p89
        %p172 = pneg %p120
        %p173 = pneg %p117
        %s174 = sand.u32 %s107, 1
        %s175 = scalar_lea.sflag [#allocation4], %s174
        %s176 = sand.u32 %s107, 1
        %s177 = smul.addr %s176, 32
        %s178 = scalar_lea.vmem [#allocation3], %s177
        %s179 = smul.u32 4, %s21
        %p180 = scmp.lt.s32.totalorder %s179, 7
        %s181 = scalar_select %p180, %s179, 7
        %s182 = smul.addr %s181, 8
        %s183 = scalar_lea.vmem %s0, %s182
        %s184 = smul.u32 4, %s21
        %s185 = smul.u32 4, %s21
        %p186 = scmp.eq.s32.totalorder %s22, 0
        // Predicated region
        $region33: #{tpu_custom_call.1} parent=31 // pred_check
          %p187 = pneg %p186
        $region34: #{tpu_custom_call.1} parent=31 // pred_check_branch
          %189 = sbr.rel (%p187) target = $region36
        $region35: #{tpu_custom_call.1} parent=31 // pred_region
          %v190 = vld [vmem:[%s183] sm:$0xff]
          %v191 = vld [vmem:[%s183 + $0x8] sm:$0xff]
          %v192 = vld [vmem:[%s183 + $0x10] sm:$0xff]
          %v193 = vld [vmem:[%s183 + $0x18] sm:$0xff]
          %v194 = vld [vmem:[%s1] sm:$0x1]
          %v195 = vld [vmem:[%s2] sm:$0x1]
          %196 = vset.pattern.permute.xlu0 0
          %197 = vperm.xlu0 %196, %v190
          %v198 = vpop.permute.xlu0 %197
          %199 = vset.pattern.permute.xlu0 0
          %200 = vperm.xlu0 %199, %v191
          %v201 = vpop.permute.xlu0 %200
          %202 = vset.pattern.permute.xlu0 0
          %203 = vperm.xlu0 %202, %v192
          %v204 = vpop.permute.xlu0 %203
          %205 = vset.pattern.permute.xlu0 0
          %206 = vperm.xlu0 %205, %v193
          %v207 = vpop.permute.xlu0 %206
          %v208 = vlaneseq
          %v209 = vshrl.u32 %v208, 7
          %v210 = vsub.s32 0, %v209
          %v211 = vrot.slane %v194, %v210
          %vm212 = vcmp.eq.s32.totalorder %v198, %v211
          %vm213 = vcmp.eq.s32.totalorder %v201, %v211
          %vm214 = vcmp.eq.s32.totalorder %v204, %v211
          %vm215 = vcmp.eq.s32.totalorder %v207, %v211
          %v216 = vlaneseq
          %v217 = vshrl.u32 %v216, 7
          %v218 = vsub.s32 0, %v217
          %v219 = vrot.slane %v195, %v218
          %v220 = vsel %vm212, %v219, 4294967295
          %v221 = vsel %vm213, %v219, 4294967295
          %v222 = vsel %vm214, %v219, 4294967295
          %v223 = vsel %vm215, %v219, 4294967295
          %vm224 = vcmask 982016
          %v225 = vsel %vm224, %v220, 2147483648
          %v226 = vand.u32 %v225, 65535
          %v227 = vshra.s32 %v225, 16
          %v228 = vcvt.s32.f32 %v226
          %v229 = vcvt.s32.f32 %v227
          %230 = vmax.xlane.f32.xlu0 %v229
          %v231 = vpop.xlane.xlu0 %230
          %vm232 = vcmp.eq.f32.partialorder %v229, %v231
          %v233 = vsel %vm232, %v228, -inf
          %234 = vmax.xlane.f32.xlu0 %v233
          %v235 = vpop.xlane.xlu0 %234
          %v236 = vcvt.f32.s32 %v235
          %v237 = vcvt.f32.s32 %v231
          %v238 = vshll.u32 %v237, 16
          %v239 = vadd.s32 %v238, %v236
          %v240 = vsel %vm224, %v221, 2147483648
          %v241 = vand.u32 %v240, 65535
          %v242 = vshra.s32 %v240, 16
          %v243 = vcvt.s32.f32 %v241
          %v244 = vcvt.s32.f32 %v242
          %245 = vmax.xlane.f32.xlu0 %v244
          %v246 = vpop.xlane.xlu0 %245
          %vm247 = vcmp.eq.f32.partialorder %v244, %v246
          %v248 = vsel %vm247, %v243, -inf
          %249 = vmax.xlane.f32.xlu0 %v248
          %v250 = vpop.xlane.xlu0 %249
          %v251 = vcvt.f32.s32 %v250
          %v252 = vcvt.f32.s32 %v246
          %v253 = vshll.u32 %v252, 16
          %v254 = vadd.s32 %v253, %v251
          %v255 = vsel %vm224, %v222, 2147483648
          %v256 = vand.u32 %v255, 65535
          %v257 = vshra.s32 %v255, 16
          %v258 = vcvt.s32.f32 %v256
          %v259 = vcvt.s32.f32 %v257
          %260 = vmax.xlane.f32.xlu0 %v259
          %v261 = vpop.xlane.xlu0 %260
          %vm262 = vcmp.eq.f32.partialorder %v259, %v261
          %v263 = vsel %vm262, %v258, -inf
          %264 = vmax.xlane.f32.xlu0 %v263
          %v265 = vpop.xlane.xlu0 %264
          %v266 = vcvt.f32.s32 %v265
          %v267 = vcvt.f32.s32 %v261
          %v268 = vshll.u32 %v267, 16
          %v269 = vadd.s32 %v268, %v266
          %v270 = vsel %vm224, %v223, 2147483648
          %v271 = vand.u32 %v270, 65535
          %v272 = vshra.s32 %v270, 16
          %v273 = vcvt.s32.f32 %v271
          %v274 = vcvt.s32.f32 %v272
          %275 = vmax.xlane.f32.xlu0 %v274
          %v276 = vpop.xlane.xlu0 %275
          %vm277 = vcmp.eq.f32.partialorder %v274, %v276
          %v278 = vsel %vm277, %v273, -inf
          %279 = vmax.xlane.f32.xlu0 %v278
          %v280 = vpop.xlane.xlu0 %279
          %v281 = vcvt.f32.s32 %v280
          %v282 = vcvt.f32.s32 %v276
          %v283 = vshll.u32 %v282, 16
          %v284 = vadd.s32 %v283, %v281
          %vm285 = vcmp.ge.s32.totalorder %v239, 0
          %vm286 = vcmp.ge.s32.totalorder %v254, 0
          %vm287 = vcmp.ge.s32.totalorder %v269, 0
          %vm288 = vcmp.ge.s32.totalorder %v284, 0
          %v289 = vsel %vm285, %v239, 127
          %v290 = vsel %vm286, %v254, 127
          %v291 = vsel %vm287, %v269, 127
          %v292 = vsel %vm288, %v284, 127
          %vm293 = vcmask 7168
          %294 = vst.msk [vmem:[#allocation2] sm:$0xff] %vm293, %v289
          %295 = vst.msk [vmem:[#allocation2 + $0x8] sm:$0xff] %vm293, %v290
          %296 = vst.msk [vmem:[#allocation2 + $0x10] sm:$0xff] %vm293, %v291
          %297 = vst.msk [vmem:[#allocation2 + $0x18] sm:$0xff] %vm293, %v292
        $region36: #{tpu_custom_call.1} parent=31 // pred_fallthru
          _
        %s298 = smul.u32 %s22, 128
        %v299 = vlaneseq
        %v300 = vand.u32 %v299, 127
        %v301 = vstv %s298
        %v302 = vadd.s32 %v301, %v300
        %v303 = vld [vmem:[#allocation2] sm:$0xff]
        %v304 = vld [vmem:[#allocation2 + $0x8] sm:$0xff]
        %v305 = vld [vmem:[#allocation2 + $0x10] sm:$0xff]
        %v306 = vld [vmem:[#allocation2 + $0x18] sm:$0xff]
        %307 = vset.pattern.permute.xlu0 0
        %308 = vperm.xlu0 %307, %v303
        %v309 = vpop.permute.xlu0 %308
        %310 = vset.pattern.permute.xlu0 0
        %311 = vperm.xlu0 %310, %v304
        %v312 = vpop.permute.xlu0 %311
        %313 = vset.pattern.permute.xlu0 0
        %314 = vperm.xlu0 %313, %v305
        %v315 = vpop.permute.xlu0 %314
        %316 = vset.pattern.permute.xlu0 0
        %317 = vperm.xlu0 %316, %v306
        %v318 = vpop.permute.xlu0 %317
        %vm319 = vcmp.eq.s32.totalorder %v302, %v309
        %vm320 = vcmp.eq.s32.totalorder %v302, %v312
        %vm321 = vcmp.eq.s32.totalorder %v302, %v315
        %vm322 = vcmp.eq.s32.totalorder %v302, %v318
        %v323 = vsel %vm319, 1, 0
        %v324 = vsel %vm320, 1, 0
        %v325 = vsel %vm321, 1, 0
        %v326 = vsel %vm322, 1, 0
        %v327 = vcvt.s32.f32 %v323
        %v328 = vcvt.s32.f32 %v324
        %v329 = vcvt.s32.f32 %v325
        %v330 = vcvt.s32.f32 %v326
        %331 = vst [vmem:[%s178] sm:$0xff] %v327
        %332 = vst [vmem:[%s178 + $0x8] sm:$0xff] %v328
        %333 = vst [vmem:[%s178 + $0x10] sm:$0xff] %v329
        %334 = vst [vmem:[%s178 + $0x18] sm:$0xff] %v330
        %s335 = sand.u32 %s107, 1
        %s336 = scalar_lea.sflag [#allocation4], %s335
        %s337 = sand.u32 %s107, 1
        %s338 = smul.addr %s337, 32
        %s339 = scalar_lea.vmem [#allocation3], %s338
        // Predicated region
        $region37: #{tpu_custom_call.1} parent=31 // pred_check
          %p340 = pneg %p117
        $region38: #{tpu_custom_call.1} parent=31 // pred_check_branch
          %342 = sbr.rel (%p340) target = $region40
        $region39: #{tpu_custom_call.1} parent=31 // pred_region
          %s343 = smul.u32 4, %s21
          %s345 = ssub.s32 512, 512
          %346 = vsyncadd %s336, %s345
          %s347 = sadd.s32 %s22, %s343
          %s348 = smul.addr %s347, 128
          %s349 = scalar_lea.hbm %s3, %s348
          %s350 = sshll.u32 %s339, 4
          %s351 = int_to_ptr.vmem [resolvable:$true] %s350
          %356 = dma.vmem_to_hbm [thread:$0]  %s351, 512, %s349, %s336, 128, 128, 8
        $region40: #{tpu_custom_call.1} parent=31 // pred_fallthru
          _
      $region32: #{tpu_custom_call.1} parent=5 // pred_fallthru
        _
      %p357 = scmp.le.s32.totalorder 2, %s12
      // Predicated region
      $region41: #{tpu_custom_call.1} parent=5 // pred_check
        %p358 = pneg %p357
      $region42: #{tpu_custom_call.1} parent=5 // pred_check_branch
        %360 = sbr.rel (%p358) target = $region44
      $region43: #{tpu_custom_call.1} parent=5 // pred_region
        %s361 = ssub.s32 %s12, 2
        // Predicated region
        $region45: #{tpu_custom_call.1} parent=43 // pred_check
          %p362 = pneg %p123
        $region46: #{tpu_custom_call.1} parent=43 // pred_check_branch
          %364 = sbr.rel (%p362) target = $region48
        $region47: #{tpu_custom_call.1} parent=43 // pred_region
          %s365 = sand.u32 %s108, 1
          %s366 = scalar_lea.sflag [#allocation4], %s365
          %s367 = sand.u32 %s108, 1
          %s368 = smul.addr %s367, 32
          %s369 = scalar_lea.vmem [#allocation3], %s368
          %370 = dma.done %s366, 512
        $region48: #{tpu_custom_call.1} parent=43 // pred_fallthru
          _
      $region44: #{tpu_custom_call.1} parent=5 // pred_fallthru
        _
    $region6: #{tpu_custom_call.1} parent=1 // loop_footer
      %s16 = sadd.s32 1, %s12
    $region7: #{tpu_custom_call.1} parent=1 // loop_footer_branch
      %11 = sbr.rel target = $region3
    $region8: #{tpu_custom_call.1} parent=1 // loop_exit
      _
    %371 = vsyncpa [#allocation4], 1
    %s372 = scalar_lea.sflag [#allocation4], 1
    %373 = vsyncpa %s372, 1

</llo_original>
